<compile_context>
chip_gen: v5e
topology: v5e:2x2
jax: 0.10.0
libtpu: 0.0.40
codegen_flags: <defaults>
</compile_context>

<pallas_src>
import jax
import jax.numpy as jnp
from jax.experimental import pallas as pl
from jax.experimental.pallas import tpu as pltpu


def _copy_kernel(x_ref, o_ref):
    # Pure copy of the current lane-dense tile.
    o_ref[...] = x_ref[...]


def _sublane_multiple(dtype) -> int:
    """Dtype-aware sublane packing multiple for block rows."""
    bits = jnp.dtype(dtype).itemsize * 8
    if bits >= 32:
        return 8
    if bits == 16:
        return 16
    return 32


def _target_block_bytes() -> int:
    """Per-chip block-size target that stays within scoped-VMEM defaults."""
    try:
        kind = jax.devices()[0].device_kind.lower()
    except Exception:  # pragma: no cover - defensive
        kind = ""
    # v5e scoped VMEM default is 16 MiB -> keep blocks ~2 MiB.
    # v6e/v7x scoped default is 32 MiB -> ~4 MiB blocks (4 live buffers = 16 MiB).
    if "v5" in kind:
        return 2 * 1024 * 1024
    return 4 * 1024 * 1024


def _pallas_identity_copy(x):
    """Materialize the identity via a lane-dense tiled Pallas copy."""
    orig_shape = x.shape
    total = x.size
    itemsize = jnp.dtype(x.dtype).itemsize
    if total == 0:
        return x

    # --- choose a lane-dense 2D layout ---------------------------------
    lanes = 0
    for cand in (4096, 2048, 1024, 512, 256, 128):
        if total % cand == 0:
            lanes = cand
            break

    if lanes == 0:
        # Element count not a multiple of 128: keep the full original last
        # dim as the lane axis (full-array dims are exempt from the (8,128)
        # rule) and tile only the leading rows.
        lanes = orig_shape[-1] if len(orig_shape) >= 1 else total
        lanes = max(lanes, 1)
    rows = total // lanes

    x2d = x.reshape(rows, lanes)

    # --- fixed block rows + cdiv grid (ragged final block is masked) ----
    sub = _sublane_multiple(x.dtype)
    row_bytes = lanes * itemsize
    block_rows = (_target_block_bytes() // max(row_bytes, 1)) // sub * sub
    block_rows = max(sub, block_rows)
    if block_rows >= rows:
        block_rows = rows  # full extent -> exempt from the sublane rule
    grid_rows = pl.cdiv(rows, block_rows)

    y2d = pl.pallas_call(
        _copy_kernel,
        out_shape=jax.ShapeDtypeStruct((rows, lanes), x.dtype),
        grid=(grid_rows,),
        in_specs=[pl.BlockSpec((block_rows, lanes), lambda i: (i, 0))],
        out_specs=pl.BlockSpec((block_rows, lanes), lambda i: (i, 0)),
        compiler_params=pltpu.CompilerParams(
            dimension_semantics=("parallel",),
        ),
        cost_estimate=pl.CostEstimate(
            flops=0,
            transcendentals=0,
            bytes_accessed=2 * total * itemsize,
        ),
    )(x2d)

    return y2d.reshape(orig_shape)


def lstmnet_forward(x, *, validate_with_pallas=False):
    """Forward pass of lstmNet: identity.

    Hot path: `return x` (zero data movement).  Set `validate_with_pallas`
    to exercise an explicit Pallas copy kernel for debugging/validation.
    """
    if not validate_with_pallas:
        return x
    return _pallas_identity_copy(x)


if __name__ == "__main__":
    key = jax.random.PRNGKey(0)
    # Small NCHW input consistent with the module's forward (arbitrary tensor).
    x = jax.random.normal(key, (2, 4, 16, 16), dtype=jnp.float32)

    # Hot path: identity, no kernel launched.
    y_fast = lstmnet_forward(x)
    jax.block_until_ready(y_fast)

    # Validation path: explicit Pallas copy kernel.
    y_pallas = lstmnet_forward(x, validate_with_pallas=True)
    jax.block_until_ready(y_pallas)

    assert y_fast.shape == x.shape and y_fast.dtype == x.dtype
    assert y_pallas.shape == x.shape and y_pallas.dtype == x.dtype
    assert bool(jnp.all(y_fast == x))
    assert bool(jnp.all(y_pallas == x))

    print("KERNEL_OK")
</pallas_src>

<mosaic_0001>
module attributes {stable_mosaic.version = 11 : i64} {
  func.func @_copy_kernel(%arg0: i32, %arg1: memref<1x2048xf32, #tpu.memory_space<vmem>>, %arg2: memref<1x2048xf32, #tpu.memory_space<vmem>>) attributes {dimension_semantics = [#tpu.dimension_semantics<parallel>], iteration_bounds = array<i64: 1>, scalar_prefetch = 0 : i64, scratch_operands = 0 : i64, tpu.core_type = #tpu.core_type<tc>, window_params = [{transform_indices = @transform_0, window_bounds = array<i64: 1, 2048>}, {transform_indices = @transform_1, window_bounds = array<i64: 1, 2048>}]} {
    %c0 = arith.constant 0 : index
    %c0_0 = arith.constant 0 : index
    %0 = vector.load %arg1[%c0, %c0_0] : memref<1x2048xf32, #tpu.memory_space<vmem>>, vector<1x2048xf32>
    %c0_1 = arith.constant 0 : index
    %c0_2 = arith.constant 0 : index
    %1 = vector.load %arg2[%c0_1, %c0_2] : memref<1x2048xf32, #tpu.memory_space<vmem>>, vector<1x2048xf32>
    tpu.vector_store %arg2[%c0_1, %c0_2], %0 {strides = array<i32>} : memref<1x2048xf32, #tpu.memory_space<vmem>>, vector<1x2048xf32>,
    return
  }
  func.func @transform_0(%arg0: i32) -> (i32, i32) {
    %c0_i32 = arith.constant 0 : i32
    %c0_i32_0 = arith.constant 0 : i32
    return %arg0, %c0_i32 : i32, i32
  }
  func.func @transform_1(%arg0: i32) -> (i32, i32) {
    %c0_i32 = arith.constant 0 : i32
    %c0_i32_0 = arith.constant 0 : i32
    return %arg0, %c0_i32 : i32, i32
  }
}

</mosaic_0001>

<llo_original>
// kernel: tpu_custom_call.1
$region0: #{tpu_custom_call.1}
  #allocation0 [shape = 'u32[]', space=smem, size = 0x4, offset = 0x4, fixed_abs, tag = 'smem constant byte address 0x4 - core index']
  #allocation1 [shape = 'u32[72,128]{1,0:T(1,128)}', space=vmem, size = 0x9000, scoped, tag = 'internal scratch']
  %s0 = inlined_call_operand.hbm [shape: f32[1,2048], index: 0, kind: input, shape index: {}]
  %s1 = inlined_call_operand.hbm [shape: f32[1,2048], index: 1, kind: output, shape index: {}]
  %s2 = sld [smem:[#allocation0]]
  $region18: #{tpu_custom_call.1} parent=0
    _
  %s4 = ssub.s32 1, %s2
  %s5 = scalar_select 0, %s4, %s2
  $region1: #{tpu_custom_call.1} parent=0
    #allocation2 [shape = 'u8[8192]{0}', space=vmem, size = 0x2000, scoped, tag = 'input window, operand 0, single buffered']
    #allocation3 [shape = 's32[1]{0}', space=sflag, size = 0x4, scoped, tag = 'scoped memory for tpu_custom_call.1']
    #allocation4 [shape = 's32[1]{0}', space=sflag, size = 0x4, scoped, tag = 'scoped memory for tpu_custom_call.1']
    #allocation5 [shape = 'u8[8192]{0}', space=vmem, size = 0x2000, scoped, tag = 'output window, operand 0, single buffered']
    %6 = vsyncpa [#allocation3], 0
    %7 = vsyncpa [#allocation4], 0
    // Predicated region
    $region2: #{tpu_custom_call.1} parent=1 // pred_check
      _
    $region3: #{tpu_custom_call.1} parent=1 // pred_check_branch
      %9 = sbr.rel (0) target = $region5
    $region4: #{tpu_custom_call.1} parent=1 // pred_region
      %11 = vsyncadd [#allocation3], 0
      %s13 = sshll.u32 %s0, 4
      %s14 = int_to_ptr.hbm [resolvable:$true] %s13
      %s15 = sshll.u32 [#allocation2], 4
      %s16 = int_to_ptr.vmem [resolvable:$true] %s15
      %18 = dma.hbm_to_vmem [thread:$0]  %s14, 256, %s16, [#allocation3]
    $region5: #{tpu_custom_call.1} parent=1 // pred_fallthru
      _
    // Predicated region
    $region6: #{tpu_custom_call.1} parent=1 // pred_check
      _
    $region7: #{tpu_custom_call.1} parent=1 // pred_check_branch
      %20 = sbr.rel (0) target = $region9
    $region8: #{tpu_custom_call.1} parent=1 // pred_region
      %22 = dma.done [#allocation3], 256
    $region9: #{tpu_custom_call.1} parent=1 // pred_fallthru
      _
    %v23 = vld [vmem:[#allocation2] sm:$0xff]
    %v24 = vld [vmem:[#allocation2 + $0x8] sm:$0xff]
    %25 = vst [vmem:[#allocation5] sm:$0xff] %v23
    %26 = vst [vmem:[#allocation5 + $0x8] sm:$0xff] %v24
    // Predicated region
    $region10: #{tpu_custom_call.1} parent=1 // pred_check
      _
    $region11: #{tpu_custom_call.1} parent=1 // pred_check_branch
      %28 = sbr.rel (0) target = $region13
    $region12: #{tpu_custom_call.1} parent=1 // pred_region
      %30 = vsyncadd [#allocation4], 0
      %s32 = sshll.u32 [#allocation5], 4
      %s33 = int_to_ptr.vmem [resolvable:$true] %s32
      %s34 = sshll.u32 %s1, 4
      %s35 = int_to_ptr.hbm [resolvable:$true] %s34
      %37 = dma.vmem_to_hbm [thread:$0]  %s33, 256, %s35, [#allocation4]
    $region13: #{tpu_custom_call.1} parent=1 // pred_fallthru
      _
    // Predicated region
    $region14: #{tpu_custom_call.1} parent=1 // pred_check
      _
    $region15: #{tpu_custom_call.1} parent=1 // pred_check_branch
      %39 = sbr.rel (0) target = $region17
    $region16: #{tpu_custom_call.1} parent=1 // pred_region
      %41 = dma.done [#allocation4], 256
    $region17: #{tpu_custom_call.1} parent=1 // pred_fallthru
      _
    %42 = vsyncpa [#allocation3], 1
    %43 = vsyncpa [#allocation4], 1

</llo_original>
